<compile_context>
chip_gen: v5e
topology: v5e:2x2
jax: 0.10.0
libtpu: 0.0.40
codegen_flags: <defaults>
</compile_context>

<pallas_src>
import jax
import jax.numpy as jnp
from jax import lax
from jax.experimental import pallas as pl
from jax.experimental.pallas import tpu as pltpu


_LANE = 128
_SUBLANE = 8
_VMEM_LIMIT = 48 * 1024 * 1024  # <= ~48 MiB: fits v7x (64 MiB), ample on v5e/v6e.


def _round_up(x, m):
    return ((x + m - 1) // m) * m


def _make_kernel(num_linear, only_linear, compute_dtype):
    """Kernel body for `num_linear` Linear layers (+ReLU between hidden layers)."""
    relu_after = [
        (not only_linear) and (i < num_linear - 1) for i in range(num_linear)
    ]

    def kernel(*refs):
        # refs = (x_ref, w0, b0, w1, b1, ..., w_last, b_last, out_ref)
        x_ref = refs[0]
        out_ref = refs[-1]
        params = refs[1:-1]

        z = x_ref[...].astype(compute_dtype)
        acc = None
        for i in range(num_linear):
            w = params[2 * i][...]        # [in_pad, out_pad], compute_dtype
            b = params[2 * i + 1][...]    # [1, out_pad], f32
            acc = jnp.dot(z, w, preferred_element_type=jnp.float32) + b
            if relu_after[i]:
                acc = jnp.maximum(acc, 0.0)
            if i < num_linear - 1:
                z = acc.astype(compute_dtype)

        # L2-normalize along the feature axis: z * rsqrt(sum(z^2)).
        sumsq = jnp.sum(acc * acc, axis=1, keepdims=True)
        # TODO(synk): faithful to PyTorch -- an all-zero row yields NaN (no eps guard).
        out_ref[...] = (acc * lax.rsqrt(sumsq)).astype(out_ref.dtype)

    return kernel


def cycle_mapper_forward(x, weights, biases, only_linear, *,
                         use_bf16=True, batch_tile=1024,
                         single_buffer_weights=True):
    """Run the CycleMapper forward pass in a single Pallas call.

    x:        [batch, ninput] float array (stays unpadded in HBM)
    weights:  list of PyTorch-layout weights, each [out_features, in_features]
    biases:   list of biases, each [out_features]
    returns:  [batch, noutput] float32 (no padded rows/lanes)
    """
    num_linear = len(weights)
    assert len(biases) == num_linear and num_linear >= 1

    # One-time glue (amortized in real use): weights as [in, out] f32 on host.
    wts = [jnp.asarray(W, jnp.float32).T for W in weights]
    bss = [jnp.asarray(b, jnp.float32) for b in biases]

    # only_linear: fold the whole affine chain into one matmul + bias on host.
    if only_linear and num_linear > 1:
        W_eff, b_eff = wts[0], bss[0]
        for Wt, b in zip(wts[1:], bss[1:]):
            W_eff = W_eff @ Wt
            b_eff = b_eff @ Wt + b
        wts, bss = [W_eff], [b_eff]
        num_linear = 1

    nin = wts[0].shape[0]
    nout = wts[-1].shape[1]
    compute_dtype = jnp.bfloat16 if use_bf16 else jnp.float32

    # Zero-pad hidden feature dims to 128 lanes.  The first layer's input dim
    # stays == ninput (so x is consumed directly), the last layer's output dim
    # stays == noutput (so the kernel stores exactly the module's output shape
    # and no host-side lane slice is needed).
    flat_params = []
    prev_width = nin
    for li, (Wt, b) in enumerate(zip(wts, bss)):
        di, do = Wt.shape
        do_p = do if li == num_linear - 1 else _round_up(do, _LANE)
        Wp = jnp.zeros((prev_width, do_p), compute_dtype).at[:di, :do].set(
            Wt.astype(compute_dtype))
        bp = jnp.zeros((1, do_p), jnp.float32).at[:, :do].set(b.reshape(1, -1))
        flat_params.append(Wp)
        flat_params.append(bp)
        prev_width = do_p

    x = jnp.asarray(x)
    batch = x.shape[0]
    assert x.shape == (batch, nin), (x.shape, nin)

    # Batch tiling: keep the last tile nearly full and aim for >= 2 grid steps
    # whenever possible so "parallel" can shard across v7x's two TensorCores.
    max_tile = max(_SUBLANE, min(batch_tile, _round_up(batch, _SUBLANE)))
    num_tiles = pl.cdiv(batch, max_tile)
    if batch >= 2 * _SUBLANE:
        num_tiles = max(num_tiles, 2)
    tb = _round_up(pl.cdiv(batch, num_tiles), _SUBLANE)

    # VMEM footprint guard: shrink the batch tile if double-buffered activation
    # tiles + resident weights would not fit comfortably under the scoped limit.
    wt_bufs = 1 if single_buffer_weights else 2
    param_bytes = sum(int(p.size) * p.dtype.itemsize for p in flat_params)
    widest = max(nin, nout, max(int(p.shape[-1]) for p in flat_params))

    def _vmem_est(t):
        est = 2 * t * nin * x.dtype.itemsize      # x tiles (double-buffered)
        est += 2 * t * nout * 4                   # out tiles (double-buffered)
        est += 4 * t * widest * 4                 # in-kernel f32 intermediates
        return est + wt_bufs * param_bytes

    while tb > _SUBLANE and _vmem_est(tb) > int(0.8 * _VMEM_LIMIT):
        tb = _round_up(tb // 2, _SUBLANE)
    # TODO(synk): if resident weights alone exceed ~40 MiB (very wide layers on
    # v7x), switch to a K/N-tiled accumulator grid instead of holding every
    # weight VMEM-resident; not needed for the shapes exercised here.

    grid = (pl.cdiv(batch, tb),)
    kernel = _make_kernel(num_linear, only_linear, compute_dtype)
    out_shape = jax.ShapeDtypeStruct((batch, nout), jnp.float32)
    compiler_params = pltpu.CompilerParams(
        dimension_semantics=("parallel",),
        vmem_limit_bytes=_VMEM_LIMIT,
    )

    def _run(weight_pipeline_mode):
        spec_kwargs = {}
        if weight_pipeline_mode is not None:
            spec_kwargs["pipeline_mode"] = weight_pipeline_mode
        # x / out tiled along batch; weights & biases use a constant index_map
        # so they stay VMEM-resident across grid iterations.
        in_specs = [pl.BlockSpec((tb, nin), lambda i: (i, 0))]
        for p in flat_params:
            in_specs.append(pl.BlockSpec(p.shape, lambda i: (0, 0), **spec_kwargs))
        out_specs = pl.BlockSpec((tb, nout), lambda i: (i, 0))
        fn = pl.pallas_call(
            kernel,
            out_shape=out_shape,
            grid=grid,
            in_specs=in_specs,
            out_specs=out_specs,
            compiler_params=compiler_params,
        )
        return fn(x, *flat_params)

    if single_buffer_weights and hasattr(pl, "Buffered"):
        try:
            # Constant-index weight blocks never change -> single buffer halves
            # their VMEM footprint (matters for wide layers on v7x).
            return _run(pl.Buffered(1))
        except Exception:
            # pipeline_mode unsupported by this JAX/Mosaic build: fall back.
            pass
    return _run(None)


def init_cycle_mapper_params(key, ninput, noutput, layer_sizes, init_std=0.02):
    """Deterministic init matching CycleMapper.init_weights:
    weight ~ Normal(0, 0.02), bias = 0."""
    sizes_in = [ninput] + list(layer_sizes)
    sizes_out = list(layer_sizes) + [noutput]
    weights, biases = [], []
    for fan_in, fan_out in zip(sizes_in, sizes_out):
        key, sub = jax.random.split(key)
        W = init_std * jax.random.normal(sub, (fan_out, fan_in), jnp.float32)
        b = jnp.zeros((fan_out,), jnp.float32)
        weights.append(W)
        biases.append(b)
    return weights, biases


def reference_forward(x, weights, biases, only_linear):
    """Pure-JAX reference (mirrors the PyTorch forward)."""
    z = x
    n = len(weights)
    for i, (W, b) in enumerate(zip(weights, biases)):
        z = z @ W.T + b
        if (not only_linear) and (i < n - 1):
            z = jnp.maximum(z, 0.0)
    norm = jnp.sqrt(jnp.sum(z * z, axis=1, keepdims=True))
    return z / norm


if __name__ == "__main__":
    key = jax.random.PRNGKey(0)

    # Small shapes consistent with the module: CycleMapper(ninput=32, noutput=32,
    # layer_sizes=[64, 48], only_linear=False), batch=8.
    batch = 8
    ninput = 32
    noutput = 32
    layer_sizes = [64, 48]

    k_params, k_x, k_x2 = jax.random.split(key, 3)
    weights, biases = init_cycle_mapper_params(
        k_params, ninput, noutput, layer_sizes
    )
    x = jax.random.normal(k_x, (batch, ninput), jnp.float32)

    # 1) f32 operands, MLP with ReLU — strict correctness check.
    out = jax.block_until_ready(
        cycle_mapper_forward(x, weights, biases, only_linear=False,
                             use_bf16=False))
    ref = reference_forward(x, weights, biases, only_linear=False)
    assert out.shape == (batch, noutput), out.shape
    assert jnp.allclose(out, ref, atol=1e-5, rtol=1e-5), (
        float(jnp.max(jnp.abs(out - ref))))
    assert jnp.allclose(jnp.sqrt(jnp.sum(out * out, axis=1)), 1.0, atol=1e-5)

    # 2) only_linear=True — the affine chain is folded into a single matmul.
    out_lin = jax.block_until_ready(
        cycle_mapper_forward(x, weights, biases, only_linear=True,
                             use_bf16=False))
    ref_lin = reference_forward(x, weights, biases, only_linear=True)
    assert jnp.allclose(out_lin, ref_lin, atol=1e-4, rtol=1e-4), (
        float(jnp.max(jnp.abs(out_lin - ref_lin))))

    # 3) Default bf16 MXU operands (f32 accumulation) + ragged batch:
    #    exercises a 2-step parallel grid and a partially out-of-bounds last
    #    batch tile (dropped OOB writes), with no host-side pad or slice.
    x2 = jax.random.normal(k_x2, (20, ninput), jnp.float32)
    out_bf = jax.block_until_ready(
        cycle_mapper_forward(x2, weights, biases, only_linear=False))
    ref_bf = reference_forward(x2, weights, biases, only_linear=False)
    assert out_bf.shape == (20, noutput), out_bf.shape
    assert bool(jnp.all(jnp.isfinite(out_bf)))
    assert jnp.allclose(jnp.sqrt(jnp.sum(out_bf * out_bf, axis=1)), 1.0,
                        atol=1e-3)
    assert jnp.allclose(out_bf, ref_bf, atol=5e-2), (
        float(jnp.max(jnp.abs(out_bf - ref_bf))))

    print("KERNEL_OK")
</pallas_src>

<mosaic_0001>
module attributes {stable_mosaic.version = 11 : i64} {
  func.func @kernel(%arg0: i32, %arg1: memref<8x32xf32, #tpu.memory_space<vmem>>, %arg2: memref<32x128xf32, #tpu.memory_space<vmem>>, %arg3: memref<1x128xf32, #tpu.memory_space<vmem>>, %arg4: memref<128x128xf32, #tpu.memory_space<vmem>>, %arg5: memref<1x128xf32, #tpu.memory_space<vmem>>, %arg6: memref<128x32xf32, #tpu.memory_space<vmem>>, %arg7: memref<1x32xf32, #tpu.memory_space<vmem>>, %arg8: memref<8x32xf32, #tpu.memory_space<vmem>>) attributes {dimension_semantics = [#tpu.dimension_semantics<parallel>], iteration_bounds = array<i64: 1>, scalar_prefetch = 0 : i64, scratch_operands = 0 : i64, tpu.core_type = #tpu.core_type<tc>, window_params = [{transform_indices = @transform_0, window_bounds = array<i64: 8, 32>}, {pipeline_mode = #tpu.pipeline_mode<synchronous>, transform_indices = @transform_1, window_bounds = array<i64: 32, 128>}, {pipeline_mode = #tpu.pipeline_mode<synchronous>, transform_indices = @transform_2, window_bounds = array<i64: 1, 128>}, {pipeline_mode = #tpu.pipeline_mode<synchronous>, transform_indices = @transform_3, window_bounds = array<i64: 128, 128>}, {pipeline_mode = #tpu.pipeline_mode<synchronous>, transform_indices = @transform_4, window_bounds = array<i64: 1, 128>}, {pipeline_mode = #tpu.pipeline_mode<synchronous>, transform_indices = @transform_5, window_bounds = array<i64: 128, 32>}, {pipeline_mode = #tpu.pipeline_mode<synchronous>, transform_indices = @transform_6, window_bounds = array<i64: 1, 32>}, {transform_indices = @transform_7, window_bounds = array<i64: 8, 32>}]} {
    %c0 = arith.constant 0 : index
    %c0_0 = arith.constant 0 : index
    %0 = vector.load %arg1[%c0, %c0_0] : memref<8x32xf32, #tpu.memory_space<vmem>>, vector<8x32xf32>
    %c0_1 = arith.constant 0 : index
    %c0_2 = arith.constant 0 : index
    %1 = vector.load %arg2[%c0_1, %c0_2] : memref<32x128xf32, #tpu.memory_space<vmem>>, vector<32x128xf32>
    %c0_3 = arith.constant 0 : index
    %c0_4 = arith.constant 0 : index
    %2 = vector.load %arg3[%c0_3, %c0_4] : memref<1x128xf32, #tpu.memory_space<vmem>>, vector<1x128xf32>
    %cst = arith.constant dense<0.000000e+00> : vector<8x128xf32>
    %3 = tpu.matmul %0, %1, %cst {dimension_numbers = #tpu.dot_dimension_numbers<[1], [0], [0], [1], [0, 0, 1, 1], [], []>} : vector<8x32xf32>, vector<32x128xf32>, vector<8x128xf32> -> vector<8x128xf32>
    %4 = vector.broadcast %2 : vector<1x128xf32> to vector<8x128xf32>
    %5 = arith.addf %3, %4 : vector<8x128xf32>
    %cst_5 = arith.constant 0.000000e+00 : f32
    %6 = vector.broadcast %cst_5 : f32 to vector<8x128xf32>
    %7 = arith.maximumf %5, %6 : vector<8x128xf32>
    %c0_6 = arith.constant 0 : index
    %c0_7 = arith.constant 0 : index
    %8 = vector.load %arg4[%c0_6, %c0_7] : memref<128x128xf32, #tpu.memory_space<vmem>>, vector<128x128xf32>
    %c0_8 = arith.constant 0 : index
    %c0_9 = arith.constant 0 : index
    %9 = vector.load %arg5[%c0_8, %c0_9] : memref<1x128xf32, #tpu.memory_space<vmem>>, vector<1x128xf32>
    %cst_10 = arith.constant dense<0.000000e+00> : vector<8x128xf32>
    %10 = tpu.matmul %7, %8, %cst_10 {dimension_numbers = #tpu.dot_dimension_numbers<[1], [0], [0], [1], [0, 0, 1, 1], [], []>} : vector<8x128xf32>, vector<128x128xf32>, vector<8x128xf32> -> vector<8x128xf32>
    %11 = vector.broadcast %9 : vector<1x128xf32> to vector<8x128xf32>
    %12 = arith.addf %10, %11 : vector<8x128xf32>
    %cst_11 = arith.constant 0.000000e+00 : f32
    %13 = vector.broadcast %cst_11 : f32 to vector<8x128xf32>
    %14 = arith.maximumf %12, %13 : vector<8x128xf32>
    %c0_12 = arith.constant 0 : index
    %c0_13 = arith.constant 0 : index
    %15 = vector.load %arg6[%c0_12, %c0_13] : memref<128x32xf32, #tpu.memory_space<vmem>>, vector<128x32xf32>
    %c0_14 = arith.constant 0 : index
    %c0_15 = arith.constant 0 : index
    %16 = vector.load %arg7[%c0_14, %c0_15] : memref<1x32xf32, #tpu.memory_space<vmem>>, vector<1x32xf32>
    %cst_16 = arith.constant dense<0.000000e+00> : vector<8x32xf32>
    %17 = tpu.matmul %14, %15, %cst_16 {dimension_numbers = #tpu.dot_dimension_numbers<[1], [0], [0], [1], [0, 0, 1, 1], [], []>} : vector<8x128xf32>, vector<128x32xf32>, vector<8x32xf32> -> vector<8x32xf32>
    %18 = vector.broadcast %16 : vector<1x32xf32> to vector<8x32xf32>
    %19 = arith.addf %17, %18 : vector<8x32xf32>
    %20 = arith.mulf %19, %19 : vector<8x32xf32>
    %cst_17 = arith.constant dense<0.000000e+00> : vector<8xf32>
    %21 = vector.multi_reduction <add>, %20, %cst_17 [1] : vector<8x32xf32> to vector<8xf32>
    %22 = vector.shape_cast %21 : vector<8xf32> to vector<8x1xf32>
    %23 = math.rsqrt %22 : vector<8x1xf32>
    %24 = vector.broadcast %23 : vector<8x1xf32> to vector<8x32xf32>
    %25 = arith.mulf %19, %24 : vector<8x32xf32>
    %c0_18 = arith.constant 0 : index
    %c0_19 = arith.constant 0 : index
    %26 = vector.load %arg8[%c0_18, %c0_19] : memref<8x32xf32, #tpu.memory_space<vmem>>, vector<8x32xf32>
    tpu.vector_store %arg8[%c0_18, %c0_19], %25 {strides = array<i32>} : memref<8x32xf32, #tpu.memory_space<vmem>>, vector<8x32xf32>,
    return
  }
  func.func @transform_0(%arg0: i32) -> (i32, i32) {
    %c0_i32 = arith.constant 0 : i32
    %c0_i32_0 = arith.constant 0 : i32
    return %arg0, %c0_i32 : i32, i32
  }
  func.func @transform_1(%arg0: i32) -> (i32, i32) {
    %c0_i32 = arith.constant 0 : i32
    %c0_i32_0 = arith.constant 0 : i32
    %c0_i32_1 = arith.constant 0 : i32
    return %c0_i32, %c0_i32_0 : i32, i32
  }
  func.func @transform_2(%arg0: i32) -> (i32, i32) {
    %c0_i32 = arith.constant 0 : i32
    %c0_i32_0 = arith.constant 0 : i32
    %c0_i32_1 = arith.constant 0 : i32
    return %c0_i32, %c0_i32_0 : i32, i32
  }
  func.func @transform_3(%arg0: i32) -> (i32, i32) {
    %c0_i32 = arith.constant 0 : i32
    %c0_i32_0 = arith.constant 0 : i32
    %c0_i32_1 = arith.constant 0 : i32
    return %c0_i32, %c0_i32_0 : i32, i32
  }
  func.func @transform_4(%arg0: i32) -> (i32, i32) {
    %c0_i32 = arith.constant 0 : i32
    %c0_i32_0 = arith.constant 0 : i32
    %c0_i32_1 = arith.constant 0 : i32
    return %c0_i32, %c0_i32_0 : i32, i32
  }
  func.func @transform_5(%arg0: i32) -> (i32, i32) {
    %c0_i32 = arith.constant 0 : i32
    %c0_i32_0 = arith.constant 0 : i32
    %c0_i32_1 = arith.constant 0 : i32
    return %c0_i32, %c0_i32_0 : i32, i32
  }
  func.func @transform_6(%arg0: i32) -> (i32, i32) {
    %c0_i32 = arith.constant 0 : i32
    %c0_i32_0 = arith.constant 0 : i32
    %c0_i32_1 = arith.constant 0 : i32
    return %c0_i32, %c0_i32_0 : i32, i32
  }
  func.func @transform_7(%arg0: i32) -> (i32, i32) {
    %c0_i32 = arith.constant 0 : i32
    %c0_i32_0 = arith.constant 0 : i32
    return %arg0, %c0_i32 : i32, i32
  }
}

module attributes {stable_mosaic.version = 11 : i64} {
  func.func @kernel(%arg0: i32, %arg1: memref<8x32xf32, #tpu.memory_space<vmem>>, %arg2: memref<32x128xf32, #tpu.memory_space<vmem>>, %arg3: memref<1x128xf32, #tpu.memory_space<vmem>>, %arg4: memref<128x128xf32, #tpu.memory_space<vmem>>, %arg5: memref<1x128xf32, #tpu.memory_space<vmem>>, %arg6: memref<128x32xf32, #tpu.memory_space<vmem>>, %arg7: memref<1x32xf32, #tpu.memory_space<vmem>>, %arg8: memref<8x32xf32, #tpu.memory_space<vmem>>) attributes {dimension_semantics = [#tpu.dimension_semantics<parallel>], iteration_bounds = array<i64: 1>, scalar_prefetch = 0 : i64, scratch_operands = 0 : i64, tpu.core_type = #tpu.core_type<tc>, window_params = [{transform_indices = @transform_0, window_bounds = array<i64: 8, 32>}, {pipeline_mode = #tpu.pipeline_mode<synchronous>, transform_indices = @transform_1, window_bounds = array<i64: 32, 128>}, {pipeline_mode = #tpu.pipeline_mode<synchronous>, transform_indices = @transform_2, window_bounds = array<i64: 1, 128>}, {pipeline_mode = #tpu.pipeline_mode<synchronous>, transform_indices = @transform_3, window_bounds = array<i64: 128, 128>}, {pipeline_mode = #tpu.pipeline_mode<synchronous>, transform_indices = @transform_4, window_bounds = array<i64: 1, 128>}, {pipeline_mode = #tpu.pipeline_mode<synchronous>, transform_indices = @transform_5, window_bounds = array<i64: 128, 32>}, {pipeline_mode = #tpu.pipeline_mode<synchronous>, transform_indices = @transform_6, window_bounds = array<i64: 1, 32>}, {transform_indices = @transform_7, window_bounds = array<i64: 8, 32>}]} {
    %c0 = arith.constant 0 : index
    %c0_0 = arith.constant 0 : index
    %0 = vector.load %arg1[%c0, %c0_0] : memref<8x32xf32, #tpu.memory_space<vmem>>, vector<8x32xf32>
    %c0_1 = arith.constant 0 : index
    %c0_2 = arith.constant 0 : index
    %1 = vector.load %arg2[%c0_1, %c0_2] : memref<32x128xf32, #tpu.memory_space<vmem>>, vector<32x128xf32>
    %c0_3 = arith.constant 0 : index
    %c0_4 = arith.constant 0 : index
    %2 = vector.load %arg3[%c0_3, %c0_4] : memref<1x128xf32, #tpu.memory_space<vmem>>, vector<1x128xf32>
    %cst = arith.constant dense<0.000000e+00> : vector<8x128xf32>
    %3 = tpu.matmul %0, %1, %cst {dimension_numbers = #tpu.dot_dimension_numbers<[1], [0], [0], [1], [0, 0, 1, 1], [], []>} : vector<8x32xf32>, vector<32x128xf32>, vector<8x128xf32> -> vector<8x128xf32>
    %4 = vector.broadcast %2 : vector<1x128xf32> to vector<8x128xf32>
    %5 = arith.addf %3, %4 : vector<8x128xf32>
    %cst_5 = arith.constant 0.000000e+00 : f32
    %6 = vector.broadcast %cst_5 : f32 to vector<8x128xf32>
    %7 = arith.maximumf %5, %6 : vector<8x128xf32>
    %c0_6 = arith.constant 0 : index
    %c0_7 = arith.constant 0 : index
    %8 = vector.load %arg4[%c0_6, %c0_7] : memref<128x128xf32, #tpu.memory_space<vmem>>, vector<128x128xf32>
    %c0_8 = arith.constant 0 : index
    %c0_9 = arith.constant 0 : index
    %9 = vector.load %arg5[%c0_8, %c0_9] : memref<1x128xf32, #tpu.memory_space<vmem>>, vector<1x128xf32>
    %cst_10 = arith.constant dense<0.000000e+00> : vector<8x128xf32>
    %10 = tpu.matmul %7, %8, %cst_10 {dimension_numbers = #tpu.dot_dimension_numbers<[1], [0], [0], [1], [0, 0, 1, 1], [], []>} : vector<8x128xf32>, vector<128x128xf32>, vector<8x128xf32> -> vector<8x128xf32>
    %11 = vector.broadcast %9 : vector<1x128xf32> to vector<8x128xf32>
    %12 = arith.addf %10, %11 : vector<8x128xf32>
    %cst_11 = arith.constant 0.000000e+00 : f32
    %13 = vector.broadcast %cst_11 : f32 to vector<8x128xf32>
    %14 = arith.maximumf %12, %13 : vector<8x128xf32>
    %c0_12 = arith.constant 0 : index
    %c0_13 = arith.constant 0 : index
    %15 = vector.load %arg6[%c0_12, %c0_13] : memref<128x32xf32, #tpu.memory_space<vmem>>, vector<128x32xf32>
    %c0_14 = arith.constant 0 : index
    %c0_15 = arith.constant 0 : index
    %16 = vector.load %arg7[%c0_14, %c0_15] : memref<1x32xf32, #tpu.memory_space<vmem>>, vector<1x32xf32>
    %cst_16 = arith.constant dense<0.000000e+00> : vector<8x32xf32>
    %17 = tpu.matmul %14, %15, %cst_16 {dimension_numbers = #tpu.dot_dimension_numbers<[1], [0], [0], [1], [0, 0, 1, 1], [], []>} : vector<8x128xf32>, vector<128x32xf32>, vector<8x32xf32> -> vector<8x32xf32>
    %18 = vector.broadcast %16 : vector<1x32xf32> to vector<8x32xf32>
    %19 = arith.addf %17, %18 : vector<8x32xf32>
    %20 = arith.mulf %19, %19 : vector<8x32xf32>
    %cst_17 = arith.constant dense<0.000000e+00> : vector<8xf32>
    %21 = vector.multi_reduction <add>, %20, %cst_17 [1] : vector<8x32xf32> to vector<8xf32>
    %22 = vector.shape_cast %21 : vector<8xf32> to vector<8x1xf32>
    %23 = math.rsqrt %22 : vector<8x1xf32>
    %24 = vector.broadcast %23 : vector<8x1xf32> to vector<8x32xf32>
    %25 = arith.mulf %19, %24 : vector<8x32xf32>
    %c0_18 = arith.constant 0 : index
    %c0_19 = arith.constant 0 : index
    %26 = vector.load %arg8[%c0_18, %c0_19] : memref<8x32xf32, #tpu.memory_space<vmem>>, vector<8x32xf32>
    tpu.vector_store %arg8[%c0_18, %c0_19], %25 {strides = array<i32>} : memref<8x32xf32, #tpu.memory_space<vmem>>, vector<8x32xf32>,
    return
  }
  func.func @transform_0(%arg0: i32) -> (i32, i32) {
    %c0_i32 = arith.constant 0 : i32
    %c0_i32_0 = arith.constant 0 : i32
    return %arg0, %c0_i32 : i32, i32
  }
  func.func @transform_1(%arg0: i32) -> (i32, i32) {
    %c0_i32 = arith.constant 0 : i32
    %c0_i32_0 = arith.constant 0 : i32
    %c0_i32_1 = arith.constant 0 : i32
    return %c0_i32, %c0_i32_0 : i32, i32
  }
  func.func @transform_2(%arg0: i32) -> (i32, i32) {
    %c0_i32 = arith.constant 0 : i32
    %c0_i32_0 = arith.constant 0 : i32
    %c0_i32_1 = arith.constant 0 : i32
    return %c0_i32, %c0_i32_0 : i32, i32
  }
  func.func @transform_3(%arg0: i32) -> (i32, i32) {
    %c0_i32 = arith.constant 0 : i32
    %c0_i32_0 = arith.constant 0 : i32
    %c0_i32_1 = arith.constant 0 : i32
    return %c0_i32, %c0_i32_0 : i32, i32
  }
  func.func @transform_4(%arg0: i32) -> (i32, i32) {
    %c0_i32 = arith.constant 0 : i32
    %c0_i32_0 = arith.constant 0 : i32
    %c0_i32_1 = arith.constant 0 : i32
    return %c0_i32, %c0_i32_0 : i32, i32
  }
  func.func @transform_5(%arg0: i32) -> (i32, i32) {
    %c0_i32 = arith.constant 0 : i32
    %c0_i32_0 = arith.constant 0 : i32
    %c0_i32_1 = arith.constant 0 : i32
    return %c0_i32, %c0_i32_0 : i32, i32
  }
  func.func @transform_6(%arg0: i32) -> (i32, i32) {
    %c0_i32 = arith.constant 0 : i32
    %c0_i32_0 = arith.constant 0 : i32
    %c0_i32_1 = arith.constant 0 : i32
    return %c0_i32, %c0_i32_0 : i32, i32
  }
  func.func @transform_7(%arg0: i32) -> (i32, i32) {
    %c0_i32 = arith.constant 0 : i32
    %c0_i32_0 = arith.constant 0 : i32
    return %arg0, %c0_i32 : i32, i32
  }
}

</mosaic_0001>

<llo_original>
// kernel: tpu_custom_call.1
$region0: #{tpu_custom_call.1}
  #allocation0 [shape = 'u32[]', space=smem, size = 0x4, offset = 0x4, fixed_abs, tag = 'smem constant byte address 0x4 - core index']
  #allocation1 [shape = 'u32[72,128]{1,0:T(1,128)}', space=vmem, size = 0x9000, scoped, tag = 'internal scratch']
  %s0 = inlined_call_operand.hbm [shape: f32[8,32], index: 0, kind: input, shape index: {}]
  %s1 = inlined_call_operand.vmem [shape: f32[32,128], index: 1, kind: input, shape index: {}]
  %s2 = inlined_call_operand.vmem [shape: f32[1,128], index: 2, kind: input, shape index: {}]
  %s3 = inlined_call_operand.vmem [shape: f32[128,128], index: 3, kind: input, shape index: {}]
  %s4 = inlined_call_operand.vmem [shape: f32[1,128], index: 4, kind: input, shape index: {}]
  %s5 = inlined_call_operand.vmem [shape: f32[128,32], index: 5, kind: input, shape index: {}]
  %s6 = inlined_call_operand.vmem [shape: f32[1,32], index: 6, kind: input, shape index: {}]
  %s7 = inlined_call_operand.hbm [shape: f32[8,32], index: 7, kind: output, shape index: {}]
  %s8 = sld [smem:[#allocation0]]
  $region42: #{tpu_custom_call.1} parent=0
    _
  %s10 = ssub.s32 1, %s8
  %s11 = scalar_select 0, %s10, %s8
  $region1: #{tpu_custom_call.1} parent=0
    #allocation2 [shape = 'u8[4096]{0}', space=vmem, size = 0x1000, scoped, tag = 'input window, operand 0, single buffered']
    #allocation3 [shape = 's32[1]{0}', space=sflag, size = 0x4, scoped, tag = 'scoped memory for tpu_custom_call.1']
    #allocation4 [shape = 's32[1]{0}', space=sflag, size = 0x4, scoped, tag = 'scoped memory for tpu_custom_call.1']
    #allocation5 [shape = 'u8[4096]{0}', space=vmem, size = 0x1000, scoped, tag = 'output window, operand 0, single buffered']
    %12 = vsyncpa [#allocation3], 0
    %13 = vsyncpa [#allocation4], 0
    // Predicated region
    $region2: #{tpu_custom_call.1} parent=1 // pred_check
      _
    $region3: #{tpu_custom_call.1} parent=1 // pred_check_branch
      %15 = sbr.rel (0) target = $region5
    $region4: #{tpu_custom_call.1} parent=1 // pred_region
      %17 = vsyncadd [#allocation3], 0
      %s19 = sshll.u32 %s0, 4
      %s20 = int_to_ptr.hbm [resolvable:$true] %s19
      %s21 = sshll.u32 [#allocation2], 4
      %s22 = int_to_ptr.vmem [resolvable:$true] %s21
      %24 = dma.hbm_to_vmem [thread:$0]  %s20, 128, %s22, [#allocation3]
    $region5: #{tpu_custom_call.1} parent=1 // pred_fallthru
      _
    // Predicated region
    $region6: #{tpu_custom_call.1} parent=1 // pred_check
      _
    $region7: #{tpu_custom_call.1} parent=1 // pred_check_branch
      %26 = sbr.rel (0) target = $region9
    $region8: #{tpu_custom_call.1} parent=1 // pred_region
      _
    $region9: #{tpu_custom_call.1} parent=1 // pred_fallthru
      _
    // Predicated region
    $region10: #{tpu_custom_call.1} parent=1 // pred_check
      _
    $region11: #{tpu_custom_call.1} parent=1 // pred_check_branch
      %28 = sbr.rel (0) target = $region13
    $region12: #{tpu_custom_call.1} parent=1 // pred_region
      _
    $region13: #{tpu_custom_call.1} parent=1 // pred_fallthru
      _
    // Predicated region
    $region14: #{tpu_custom_call.1} parent=1 // pred_check
      _
    $region15: #{tpu_custom_call.1} parent=1 // pred_check_branch
      %30 = sbr.rel (0) target = $region17
    $region16: #{tpu_custom_call.1} parent=1 // pred_region
      _
    $region17: #{tpu_custom_call.1} parent=1 // pred_fallthru
      _
    // Predicated region
    $region18: #{tpu_custom_call.1} parent=1 // pred_check
      _
    $region19: #{tpu_custom_call.1} parent=1 // pred_check_branch
      %32 = sbr.rel (0) target = $region21
    $region20: #{tpu_custom_call.1} parent=1 // pred_region
      _
    $region21: #{tpu_custom_call.1} parent=1 // pred_fallthru
      _
    // Predicated region
    $region22: #{tpu_custom_call.1} parent=1 // pred_check
      _
    $region23: #{tpu_custom_call.1} parent=1 // pred_check_branch
      %34 = sbr.rel (0) target = $region25
    $region24: #{tpu_custom_call.1} parent=1 // pred_region
      _
    $region25: #{tpu_custom_call.1} parent=1 // pred_fallthru
      _
    // Predicated region
    $region26: #{tpu_custom_call.1} parent=1 // pred_check
      _
    $region27: #{tpu_custom_call.1} parent=1 // pred_check_branch
      %36 = sbr.rel (0) target = $region29
    $region28: #{tpu_custom_call.1} parent=1 // pred_region
      _
    $region29: #{tpu_custom_call.1} parent=1 // pred_fallthru
      _
    // Predicated region
    $region30: #{tpu_custom_call.1} parent=1 // pred_check
      _
    $region31: #{tpu_custom_call.1} parent=1 // pred_check_branch
      %38 = sbr.rel (0) target = $region33
    $region32: #{tpu_custom_call.1} parent=1 // pred_region
      %40 = dma.done [#allocation3], 128
    $region33: #{tpu_custom_call.1} parent=1 // pred_fallthru
      _
    %v41 = vld [vmem:[#allocation2] sm:$0xff]
    %v42 = vld [vmem:[%s1] sm:$0xff]
    %v43 = vld [vmem:[%s1 + $0x8] sm:$0xff]
    %v44 = vld [vmem:[%s1 + $0x10] sm:$0xff]
    %v45 = vld [vmem:[%s1 + $0x18] sm:$0xff]
    %v46 = vld [vmem:[%s2] sm:$0x1]
    %v48 = vperm.slane %v46, 0
    %vm50 = vcmask 261120
    %v52 = vsel %vm50, %v41, 0
    %54 = vmatpush.msra.mxu0 0.0
    %55 = vmatpush.msra.mxu0 0.0
    %56 = vmatpush.msra.mxu0 0.0
    %57 = vmatpush.msra.mxu0 0.0
    %58 = vmatpush.msra.mxu0 0.0
    %59 = vmatpush.msra.mxu0 0.0
    %60 = vmatpush.msra.mxu0 0.0
    %61 = vmatpush.msra.mxu0 0.0
    %62 = vmatpush.msra.mxu0 0.0
    %63 = vmatpush.msra.mxu0 0.0
    %64 = vmatpush.msra.mxu0 0.0
    %65 = vmatpush.msra.mxu0 0.0
    %66 = vmatpush.msra.mxu0 %v45
    %67 = vmatpush.msra.mxu0 %v44
    %68 = vmatpush.msra.mxu0 %v43
    %69 = vmatpush.msra.mxu0 %v42
    %70 = vmatmul.f32.gmra.mxu0 %v52
    %v71 = vpop.f32.mrf.mxu0
    %v72 = vadd.f32 %v48, %v71
    %73 = vdwg.mxu0
    %v74 = vmax.f32 %v72, 0.0
    %v75 = vld [vmem:[%s3] sm:$0xff]
    %v76 = vld [vmem:[%s3 + $0x8] sm:$0xff]
    %v77 = vld [vmem:[%s3 + $0x10] sm:$0xff]
    %v78 = vld [vmem:[%s3 + $0x18] sm:$0xff]
    %v79 = vld [vmem:[%s3 + $0x20] sm:$0xff]
    %v80 = vld [vmem:[%s3 + $0x28] sm:$0xff]
    %v81 = vld [vmem:[%s3 + $0x30] sm:$0xff]
    %v82 = vld [vmem:[%s3 + $0x38] sm:$0xff]
    %v83 = vld [vmem:[%s3 + $0x40] sm:$0xff]
    %v84 = vld [vmem:[%s3 + $0x48] sm:$0xff]
    %v85 = vld [vmem:[%s3 + $0x50] sm:$0xff]
    %v86 = vld [vmem:[%s3 + $0x58] sm:$0xff]
    %v87 = vld [vmem:[%s3 + $0x60] sm:$0xff]
    %v88 = vld [vmem:[%s3 + $0x68] sm:$0xff]
    %v89 = vld [vmem:[%s3 + $0x70] sm:$0xff]
    %v90 = vld [vmem:[%s3 + $0x78] sm:$0xff]
    %v91 = vld [vmem:[%s4] sm:$0x1]
    %v93 = vperm.slane %v91, 0
    %95 = vmatpush.msra.mxu0 %v90
    %96 = vmatpush.msra.mxu0 %v89
    %97 = vmatpush.msra.mxu0 %v88
    %98 = vmatpush.msra.mxu0 %v87
    %99 = vmatpush.msra.mxu0 %v86
    %100 = vmatpush.msra.mxu0 %v85
    %101 = vmatpush.msra.mxu0 %v84
    %102 = vmatpush.msra.mxu0 %v83
    %103 = vmatpush.msra.mxu0 %v82
    %104 = vmatpush.msra.mxu0 %v81
    %105 = vmatpush.msra.mxu0 %v80
    %106 = vmatpush.msra.mxu0 %v79
    %107 = vmatpush.msra.mxu0 %v78
    %108 = vmatpush.msra.mxu0 %v77
    %109 = vmatpush.msra.mxu0 %v76
    %110 = vmatpush.msra.mxu0 %v75
    %111 = vmatmul.f32.gmra.mxu0 %v74
    %v112 = vpop.f32.mrf.mxu0
    %v113 = vadd.f32 %v93, %v112
    %114 = vdwg.mxu0
    %v115 = vmax.f32 %v113, 0.0
    %v116 = vld [vmem:[%s5] sm:$0xff]
    %v117 = vld [vmem:[%s5 + $0x8] sm:$0xff]
    %v118 = vld [vmem:[%s5 + $0x10] sm:$0xff]
    %v119 = vld [vmem:[%s5 + $0x18] sm:$0xff]
    %v120 = vld [vmem:[%s5 + $0x20] sm:$0xff]
    %v121 = vld [vmem:[%s5 + $0x28] sm:$0xff]
    %v122 = vld [vmem:[%s5 + $0x30] sm:$0xff]
    %v123 = vld [vmem:[%s5 + $0x38] sm:$0xff]
    %v124 = vld [vmem:[%s5 + $0x40] sm:$0xff]
    %v125 = vld [vmem:[%s5 + $0x48] sm:$0xff]
    %v126 = vld [vmem:[%s5 + $0x50] sm:$0xff]
    %v127 = vld [vmem:[%s5 + $0x58] sm:$0xff]
    %v128 = vld [vmem:[%s5 + $0x60] sm:$0xff]
    %v129 = vld [vmem:[%s5 + $0x68] sm:$0xff]
    %v130 = vld [vmem:[%s5 + $0x70] sm:$0xff]
    %v131 = vld [vmem:[%s5 + $0x78] sm:$0xff]
    %v132 = vld [vmem:[%s6] sm:$0x1]
    %v134 = vperm.slane %v132, 0
    %136 = vmatpush.msra.mxu0 %v131
    %137 = vmatpush.msra.mxu0 %v130
    %138 = vmatpush.msra.mxu0 %v129
    %139 = vmatpush.msra.mxu0 %v128
    %140 = vmatpush.msra.mxu0 %v127
    %141 = vmatpush.msra.mxu0 %v126
    %142 = vmatpush.msra.mxu0 %v125
    %143 = vmatpush.msra.mxu0 %v124
    %144 = vmatpush.msra.mxu0 %v123
    %145 = vmatpush.msra.mxu0 %v122
    %146 = vmatpush.msra.mxu0 %v121
    %147 = vmatpush.msra.mxu0 %v120
    %148 = vmatpush.msra.mxu0 %v119
    %149 = vmatpush.msra.mxu0 %v118
    %150 = vmatpush.msra.mxu0 %v117
    %151 = vmatpush.msra.mxu0 %v116
    %152 = vmatmul.f32.gmra.mxu0 %v115
    %v153 = vpop.f32.mrf.mxu0
    %v154 = vadd.f32 %v134, %v153
    %155 = vdwg.mxu0
    %v156 = vmul.f32 %v154, %v154
    %v157 = vsel %vm50, %v156, 0.0
    %158 = vadd.xlane.f32.xlu0 %v157
    %v159 = vpop.xlane.xlu0 %158
    %v160 = vrsqrt.pop %v159
    %v161 = vmul.f32 %v160, %v159
    %v162 = vmul.f32 %v161, %v160
    %v163 = vmul.f32 0.5, %v162
    %v164 = vsub.f32 1.5, %v163
    %v165 = vmul.f32 %v160, %v164
    %vm166 = vweird.f32 %v159
    %vm167 = vweird.f32 %v160
    %vm168 = vmor %vm166, %vm167
    %v169 = vsel %vm168, %v160, %v165
    %v170 = vmul.f32 %v154, %v169
    %171 = vst.msk [vmem:[#allocation5] sm:$0xff] %vm50, %v170
    // Predicated region
    $region34: #{tpu_custom_call.1} parent=1 // pred_check
      _
    $region35: #{tpu_custom_call.1} parent=1 // pred_check_branch
      %173 = sbr.rel (0) target = $region37
    $region36: #{tpu_custom_call.1} parent=1 // pred_region
      %175 = vsyncadd [#allocation4], 0
      %s177 = sshll.u32 [#allocation5], 4
      %s178 = int_to_ptr.vmem [resolvable:$true] %s177
      %s179 = sshll.u32 %s7, 4
      %s180 = int_to_ptr.hbm [resolvable:$true] %s179
      %182 = dma.vmem_to_hbm [thread:$0]  %s178, 128, %s180, [#allocation4]
    $region37: #{tpu_custom_call.1} parent=1 // pred_fallthru
      _
    // Predicated region
    $region38: #{tpu_custom_call.1} parent=1 // pred_check
      _
    $region39: #{tpu_custom_call.1} parent=1 // pred_check_branch
      %184 = sbr.rel (0) target = $region41
    $region40: #{tpu_custom_call.1} parent=1 // pred_region
      %186 = dma.done [#allocation4], 128
    $region41: #{tpu_custom_call.1} parent=1 // pred_fallthru
      _
    %187 = vsyncpa [#allocation3], 1
    %188 = vsyncpa [#allocation4], 1

// kernel: tpu_custom_call.1
$region0: #{tpu_custom_call.1}
  #allocation0 [shape = 'u32[]', space=smem, size = 0x4, offset = 0x4, fixed_abs, tag = 'smem constant byte address 0x4 - core index']
  #allocation1 [shape = 'u32[72,128]{1,0:T(1,128)}', space=vmem, size = 0x9000, scoped, tag = 'internal scratch']
  %s0 = inlined_call_operand.hbm [shape: f32[8,32], index: 0, kind: input, shape index: {}]
  %s1 = inlined_call_operand.vmem [shape: f32[32,128], index: 1, kind: input, shape index: {}]
  %s2 = inlined_call_operand.vmem [shape: f32[1,128], index: 2, kind: input, shape index: {}]
  %s3 = inlined_call_operand.vmem [shape: f32[128,128], index: 3, kind: input, shape index: {}]
  %s4 = inlined_call_operand.vmem [shape: f32[1,128], index: 4, kind: input, shape index: {}]
  %s5 = inlined_call_operand.vmem [shape: f32[128,32], index: 5, kind: input, shape index: {}]
  %s6 = inlined_call_operand.vmem [shape: f32[1,32], index: 6, kind: input, shape index: {}]
  %s7 = inlined_call_operand.hbm [shape: f32[8,32], index: 7, kind: output, shape index: {}]
  %s8 = sld [smem:[#allocation0]]
  $region42: #{tpu_custom_call.1} parent=0
    _
  %s10 = ssub.s32 1, %s8
  %s11 = scalar_select 0, %s10, %s8
  $region1: #{tpu_custom_call.1} parent=0
    #allocation2 [shape = 'u8[4096]{0}', space=vmem, size = 0x1000, scoped, tag = 'input window, operand 0, single buffered']
    #allocation3 [shape = 's32[1]{0}', space=sflag, size = 0x4, scoped, tag = 'scoped memory for tpu_custom_call.1']
    #allocation4 [shape = 's32[1]{0}', space=sflag, size = 0x4, scoped, tag = 'scoped memory for tpu_custom_call.1']
    #allocation5 [shape = 'u8[4096]{0}', space=vmem, size = 0x1000, scoped, tag = 'output window, operand 0, single buffered']
    %12 = vsyncpa [#allocation3], 0
    %13 = vsyncpa [#allocation4], 0
    // Predicated region
    $region2: #{tpu_custom_call.1} parent=1 // pred_check
      _
    $region3: #{tpu_custom_call.1} parent=1 // pred_check_branch
      %15 = sbr.rel (0) target = $region5
    $region4: #{tpu_custom_call.1} parent=1 // pred_region
      %17 = vsyncadd [#allocation3], 0
      %s19 = sshll.u32 %s0, 4
      %s20 = int_to_ptr.hbm [resolvable:$true] %s19
      %s21 = sshll.u32 [#allocation2], 4
      %s22 = int_to_ptr.vmem [resolvable:$true] %s21
      %24 = dma.hbm_to_vmem [thread:$0]  %s20, 128, %s22, [#allocation3]
    $region5: #{tpu_custom_call.1} parent=1 // pred_fallthru
      _
    // Predicated region
    $region6: #{tpu_custom_call.1} parent=1 // pred_check
      _
    $region7: #{tpu_custom_call.1} parent=1 // pred_check_branch
      %26 = sbr.rel (0) target = $region9
    $region8: #{tpu_custom_call.1} parent=1 // pred_region
      _
    $region9: #{tpu_custom_call.1} parent=1 // pred_fallthru
      _
    // Predicated region
    $region10: #{tpu_custom_call.1} parent=1 // pred_check
      _
    $region11: #{tpu_custom_call.1} parent=1 // pred_check_branch
      %28 = sbr.rel (0) target = $region13
    $region12: #{tpu_custom_call.1} parent=1 // pred_region
      _
    $region13: #{tpu_custom_call.1} parent=1 // pred_fallthru
      _
    // Predicated region
    $region14: #{tpu_custom_call.1} parent=1 // pred_check
      _
    $region15: #{tpu_custom_call.1} parent=1 // pred_check_branch
      %30 = sbr.rel (0) target = $region17
    $region16: #{tpu_custom_call.1} parent=1 // pred_region
      _
    $region17: #{tpu_custom_call.1} parent=1 // pred_fallthru
      _
    // Predicated region
    $region18: #{tpu_custom_call.1} parent=1 // pred_check
      _
    $region19: #{tpu_custom_call.1} parent=1 // pred_check_branch
      %32 = sbr.rel (0) target = $region21
    $region20: #{tpu_custom_call.1} parent=1 // pred_region
      _
    $region21: #{tpu_custom_call.1} parent=1 // pred_fallthru
      _
    // Predicated region
    $region22: #{tpu_custom_call.1} parent=1 // pred_check
      _
    $region23: #{tpu_custom_call.1} parent=1 // pred_check_branch
      %34 = sbr.rel (0) target = $region25
    $region24: #{tpu_custom_call.1} parent=1 // pred_region
      _
    $region25: #{tpu_custom_call.1} parent=1 // pred_fallthru
      _
    // Predicated region
    $region26: #{tpu_custom_call.1} parent=1 // pred_check
      _
    $region27: #{tpu_custom_call.1} parent=1 // pred_check_branch
      %36 = sbr.rel (0) target = $region29
    $region28: #{tpu_custom_call.1} parent=1 // pred_region
      _
    $region29: #{tpu_custom_call.1} parent=1 // pred_fallthru
      _
    // Predicated region
    $region30: #{tpu_custom_call.1} parent=1 // pred_check
      _
    $region31: #{tpu_custom_call.1} parent=1 // pred_check_branch
      %38 = sbr.rel (0) target = $region33
    $region32: #{tpu_custom_call.1} parent=1 // pred_region
      %40 = dma.done [#allocation3], 128
    $region33: #{tpu_custom_call.1} parent=1 // pred_fallthru
      _
    %v41 = vld [vmem:[#allocation2] sm:$0xff]
    %v42 = vld [vmem:[%s1] sm:$0xff]
    %v43 = vld [vmem:[%s1 + $0x8] sm:$0xff]
    %v44 = vld [vmem:[%s1 + $0x10] sm:$0xff]
    %v45 = vld [vmem:[%s1 + $0x18] sm:$0xff]
    %v46 = vld [vmem:[%s2] sm:$0x1]
    %v48 = vperm.slane %v46, 0
    %vm50 = vcmask 261120
    %v52 = vsel %vm50, %v41, 0
    %54 = vmatpush.msra.mxu0 0.0
    %55 = vmatpush.msra.mxu0 0.0
    %56 = vmatpush.msra.mxu0 0.0
    %57 = vmatpush.msra.mxu0 0.0
    %58 = vmatpush.msra.mxu0 0.0
    %59 = vmatpush.msra.mxu0 0.0
    %60 = vmatpush.msra.mxu0 0.0
    %61 = vmatpush.msra.mxu0 0.0
    %62 = vmatpush.msra.mxu0 0.0
    %63 = vmatpush.msra.mxu0 0.0
    %64 = vmatpush.msra.mxu0 0.0
    %65 = vmatpush.msra.mxu0 0.0
    %66 = vmatpush.msra.mxu0 %v45
    %67 = vmatpush.msra.mxu0 %v44
    %68 = vmatpush.msra.mxu0 %v43
    %69 = vmatpush.msra.mxu0 %v42
    %70 = vmatmul.f32.gmra.mxu0 %v52
    %v71 = vpop.f32.mrf.mxu0
    %v72 = vadd.f32 %v48, %v71
    %73 = vdwg.mxu0
    %v74 = vmax.f32 %v72, 0.0
    %v75 = vld [vmem:[%s3] sm:$0xff]
    %v76 = vld [vmem:[%s3 + $0x8] sm:$0xff]
    %v77 = vld [vmem:[%s3 + $0x10] sm:$0xff]
    %v78 = vld [vmem:[%s3 + $0x18] sm:$0xff]
    %v79 = vld [vmem:[%s3 + $0x20] sm:$0xff]
    %v80 = vld [vmem:[%s3 + $0x28] sm:$0xff]
    %v81 = vld [vmem:[%s3 + $0x30] sm:$0xff]
    %v82 = vld [vmem:[%s3 + $0x38] sm:$0xff]
    %v83 = vld [vmem:[%s3 + $0x40] sm:$0xff]
    %v84 = vld [vmem:[%s3 + $0x48] sm:$0xff]
    %v85 = vld [vmem:[%s3 + $0x50] sm:$0xff]
    %v86 = vld [vmem:[%s3 + $0x58] sm:$0xff]
    %v87 = vld [vmem:[%s3 + $0x60] sm:$0xff]
    %v88 = vld [vmem:[%s3 + $0x68] sm:$0xff]
    %v89 = vld [vmem:[%s3 + $0x70] sm:$0xff]
    %v90 = vld [vmem:[%s3 + $0x78] sm:$0xff]
    %v91 = vld [vmem:[%s4] sm:$0x1]
    %v93 = vperm.slane %v91, 0
    %95 = vmatpush.msra.mxu0 %v90
    %96 = vmatpush.msra.mxu0 %v89
    %97 = vmatpush.msra.mxu0 %v88
    %98 = vmatpush.msra.mxu0 %v87
    %99 = vmatpush.msra.mxu0 %v86
    %100 = vmatpush.msra.mxu0 %v85
    %101 = vmatpush.msra.mxu0 %v84
    %102 = vmatpush.msra.mxu0 %v83
    %103 = vmatpush.msra.mxu0 %v82
    %104 = vmatpush.msra.mxu0 %v81
    %105 = vmatpush.msra.mxu0 %v80
    %106 = vmatpush.msra.mxu0 %v79
    %107 = vmatpush.msra.mxu0 %v78
    %108 = vmatpush.msra.mxu0 %v77
    %109 = vmatpush.msra.mxu0 %v76
    %110 = vmatpush.msra.mxu0 %v75
    %111 = vmatmul.f32.gmra.mxu0 %v74
    %v112 = vpop.f32.mrf.mxu0
    %v113 = vadd.f32 %v93, %v112
    %114 = vdwg.mxu0
    %v115 = vmax.f32 %v113, 0.0
    %v116 = vld [vmem:[%s5] sm:$0xff]
    %v117 = vld [vmem:[%s5 + $0x8] sm:$0xff]
    %v118 = vld [vmem:[%s5 + $0x10] sm:$0xff]
    %v119 = vld [vmem:[%s5 + $0x18] sm:$0xff]
    %v120 = vld [vmem:[%s5 + $0x20] sm:$0xff]
    %v121 = vld [vmem:[%s5 + $0x28] sm:$0xff]
    %v122 = vld [vmem:[%s5 + $0x30] sm:$0xff]
    %v123 = vld [vmem:[%s5 + $0x38] sm:$0xff]
    %v124 = vld [vmem:[%s5 + $0x40] sm:$0xff]
    %v125 = vld [vmem:[%s5 + $0x48] sm:$0xff]
    %v126 = vld [vmem:[%s5 + $0x50] sm:$0xff]
    %v127 = vld [vmem:[%s5 + $0x58] sm:$0xff]
    %v128 = vld [vmem:[%s5 + $0x60] sm:$0xff]
    %v129 = vld [vmem:[%s5 + $0x68] sm:$0xff]
    %v130 = vld [vmem:[%s5 + $0x70] sm:$0xff]
    %v131 = vld [vmem:[%s5 + $0x78] sm:$0xff]
    %v132 = vld [vmem:[%s6] sm:$0x1]
    %v134 = vperm.slane %v132, 0
    %136 = vmatpush.msra.mxu0 %v131
    %137 = vmatpush.msra.mxu0 %v130
    %138 = vmatpush.msra.mxu0 %v129
    %139 = vmatpush.msra.mxu0 %v128
    %140 = vmatpush.msra.mxu0 %v127
    %141 = vmatpush.msra.mxu0 %v126
    %142 = vmatpush.msra.mxu0 %v125
    %143 = vmatpush.msra.mxu0 %v124
    %144 = vmatpush.msra.mxu0 %v123
    %145 = vmatpush.msra.mxu0 %v122
    %146 = vmatpush.msra.mxu0 %v121
    %147 = vmatpush.msra.mxu0 %v120
    %148 = vmatpush.msra.mxu0 %v119
    %149 = vmatpush.msra.mxu0 %v118
    %150 = vmatpush.msra.mxu0 %v117
    %151 = vmatpush.msra.mxu0 %v116
    %152 = vmatmul.f32.gmra.mxu0 %v115
    %v153 = vpop.f32.mrf.mxu0
    %v154 = vadd.f32 %v134, %v153
    %155 = vdwg.mxu0
    %v156 = vmul.f32 %v154, %v154
    %v157 = vsel %vm50, %v156, 0.0
    %158 = vadd.xlane.f32.xlu0 %v157
    %v159 = vpop.xlane.xlu0 %158
    %v160 = vrsqrt.pop %v159
    %v161 = vmul.f32 %v160, %v159
    %v162 = vmul.f32 %v161, %v160
    %v163 = vmul.f32 0.5, %v162
    %v164 = vsub.f32 1.5, %v163
    %v165 = vmul.f32 %v160, %v164
    %vm166 = vweird.f32 %v159
    %vm167 = vweird.f32 %v160
    %vm168 = vmor %vm166, %vm167
    %v169 = vsel %vm168, %v160, %v165
    %v170 = vmul.f32 %v154, %v169
    %171 = vst.msk [vmem:[#allocation5] sm:$0xff] %vm50, %v170
    // Predicated region
    $region34: #{tpu_custom_call.1} parent=1 // pred_check
      _
    $region35: #{tpu_custom_call.1} parent=1 // pred_check_branch
      %173 = sbr.rel (0) target = $region37
    $region36: #{tpu_custom_call.1} parent=1 // pred_region
      %175 = vsyncadd [#allocation4], 0
      %s177 = sshll.u32 [#allocation5], 4
      %s178 = int_to_ptr.vmem [resolvable:$true] %s177
      %s179 = sshll.u32 %s7, 4
      %s180 = int_to_ptr.hbm [resolvable:$true] %s179
      %182 = dma.vmem_to_hbm [thread:$0]  %s178, 128, %s180, [#allocation4]
    $region37: #{tpu_custom_call.1} parent=1 // pred_fallthru
      _
    // Predicated region
    $region38: #{tpu_custom_call.1} parent=1 // pred_check
      _
    $region39: #{tpu_custom_call.1} parent=1 // pred_check_branch
      %184 = sbr.rel (0) target = $region41
    $region40: #{tpu_custom_call.1} parent=1 // pred_region
      %186 = dma.done [#allocation4], 128
    $region41: #{tpu_custom_call.1} parent=1 // pred_fallthru
      _
    %187 = vsyncpa [#allocation3], 1
    %188 = vsyncpa [#allocation4], 1

</llo_original>
